<compile_context>
chip_gen: v7x
topology: tpu7x:2x2x1
jax: 0.10.0
libtpu: 0.0.40
codegen_flags: <defaults>
</compile_context>

<pallas_src>
import math
import jax
import jax.numpy as jnp
from jax.experimental import pallas as pl
from jax.experimental.pallas import tpu as pltpu


# ---------------------------------------------------------------------------
# Kernels: pure per-tile work -- (3,C) @ (C,T) matmul + bias (+ skip) add.
# ---------------------------------------------------------------------------
def _make_kernel(has_skip, precision):
    if has_skip:
        def kernel(w_ref, bias_ref, x_ref, skip_ref, out_ref):
            y = jnp.dot(w_ref[0], x_ref[0],
                        preferred_element_type=jnp.float32,
                        precision=precision)                      # (3, T) f32
            out_ref[0] = (y + bias_ref[...]
                          + skip_ref[0].astype(jnp.float32)).astype(out_ref.dtype)
    else:
        def kernel(w_ref, bias_ref, x_ref, out_ref):
            y = jnp.dot(w_ref[0], x_ref[0],
                        preferred_element_type=jnp.float32,
                        precision=precision)
            out_ref[0] = (y + bias_ref[...]).astype(out_ref.dtype)
    return kernel


def _tpu_vmem_capacity_bytes():
    try:
        return int(pltpu.get_tpu_info().vmem_capacity_bytes)
    except Exception:
        return 64 << 20  # conservative default (v7x has the smallest VMEM)


def _pick_hw_tile(C, HW, x_isz, has_skip, budget_bytes, max_hw_tile):
    # double-buffered per-lane cost: x tile + f32 out tile (+ skip tile)
    per_lane = 2 * (C * x_isz + 3 * 4 + (3 * x_isz if has_skip else 0))
    t_cap = max(128, int(budget_bytes) // per_lane)
    if HW <= min(t_cap, max_hw_tile):
        return HW, per_lane                      # single full-extent tile
    t = min(t_cap, max_hw_tile, HW)
    t = max(128, (t // 128) * 128)               # (8,128) rule: lanes % 128 == 0
    return t, per_lane


def to_rgb_forward(x, style, params, skip=None, upsample=True,
                   compute_dtype=None, precision=None,
                   max_hw_tile=8192, vmem_budget_bytes=None):
    """x: (B, C, H, W), style: (B, F), skip: (B, 3, H//2, W//2) or (B,3,H,W) or None.

    compute_dtype: dtype used to stream x/skip/w through the kernel (e.g.
      jnp.bfloat16 to halve HBM traffic); accumulation stays f32.
    precision: optional jax.lax.Precision for the in-kernel matmul
      (use HIGHEST for bit-faithfulness to a PyTorch fp32 reference).
    """
    B, C, H, W = x.shape
    HW = H * W
    cdt = jnp.dtype(compute_dtype) if compute_dtype is not None else jnp.dtype(x.dtype)
    x_isz = cdt.itemsize

    # ---- hoisted modulation: tiny (B,3,C) op, done once outside the hot loop
    s = style.astype(jnp.float32) @ params["mod_w"].T.astype(jnp.float32) \
        + params["mod_b"].astype(jnp.float32)                     # (B, C)
    w = (params["conv_w"][None, :, :] * s[:, None, :]).astype(cdt)  # (B, 3, C)
    bias = params["rgb_b"].reshape(3, 1).astype(jnp.float32)        # (3, 1)

    x2 = x.reshape(B, C, HW).astype(cdt)

    has_skip = skip is not None
    skip2 = None
    if has_skip:
        if upsample:
            # TODO(synk): fuse the 2x bilinear upsample into the kernel (VPU
            # muls + pltpu.roll on a low-res resident skip tile) to avoid the
            # full-res (B,3,H,W) HBM round trip (~24*HW extra bytes/sample).
            skip = jax.image.resize(skip.astype(jnp.float32), (B, 3, H, W),
                                    method="bilinear")
        skip2 = skip.reshape(B, 3, HW).astype(cdt)

    # ---- spatial tiling sized for this generation's VMEM --------------------
    vmem_cap = _tpu_vmem_capacity_bytes()
    if vmem_budget_bytes is None:
        vmem_budget_bytes = max(8 << 20, vmem_cap // 4)
    T, per_lane = _pick_hw_tile(C, HW, x_isz, has_skip, vmem_budget_bytes,
                                max_hw_tile)
    n_t = pl.cdiv(HW, T)
    HW_pad = n_t * T
    if HW_pad != HW:
        pad = [(0, 0), (0, 0), (0, HW_pad - HW)]
        x2 = jnp.pad(x2, pad)
        if has_skip:
            skip2 = jnp.pad(skip2, pad)

    in_specs = [
        pl.BlockSpec((1, 3, C), lambda b, t: (b, 0, 0)),   # per-sample modulated weight
        pl.BlockSpec((3, 1), lambda b, t: (0, 0)),         # rgb bias
        pl.BlockSpec((1, C, T), lambda b, t: (b, 0, t)),   # x tile (HW on lanes)
    ]
    args = [w, bias, x2]
    if has_skip:
        in_specs.append(pl.BlockSpec((1, 3, T), lambda b, t: (b, 0, t)))
        args.append(skip2)

    cost = pl.CostEstimate(
        flops=int(2 * 3 * C * HW * B),
        transcendentals=0,
        bytes_accessed=int(B * C * HW * x_isz          # x
                           + B * 3 * HW * 4            # out (f32)
                           + (B * 3 * HW * x_isz if has_skip else 0)
                           + B * 3 * C * x_isz),       # modulated weights
    )

    # double-buffered working set + resident odds and ends, with headroom
    working = T * per_lane + 4 * (3 * C * 4 + 3 * 4)
    vmem_limit = int(min(max(32 << 20, working * 2 + (4 << 20)),
                         max(32 << 20, vmem_cap * 3 // 4)))

    out = pl.pallas_call(
        _make_kernel(has_skip, precision),
        out_shape=jax.ShapeDtypeStruct((B, 3, HW_pad), jnp.float32),
        grid_spec=pltpu.PrefetchScalarGridSpec(
            num_scalar_prefetch=0,
            grid=(B, n_t),
            in_specs=in_specs,
            out_specs=pl.BlockSpec((1, 3, T), lambda b, t: (b, 0, t)),
        ),
        compiler_params=pltpu.CompilerParams(
            dimension_semantics=("parallel", "parallel"),
            vmem_limit_bytes=vmem_limit),
        cost_estimate=cost,
    )(*args)

    if HW_pad != HW:
        out = out[:, :, :HW]
    return out.reshape(B, 3, H, W)


# ---------------------------------------------------------------------------
# Init + pure-JAX reference (correctness check)
# ---------------------------------------------------------------------------
def init_to_rgb_params(key, in_channels, num_style_feat):
    k1, k2 = jax.random.split(key)
    mod_w = jax.random.normal(k1, (in_channels, num_style_feat),
                              jnp.float32) * (1.0 / math.sqrt(num_style_feat))
    mod_b = jnp.ones((in_channels,), jnp.float32)
    conv_w = jax.random.normal(k2, (3, in_channels),
                               jnp.float32) / math.sqrt(in_channels * 1.0)
    rgb_b = jnp.zeros((3,), jnp.float32)
    return {"mod_w": mod_w, "mod_b": mod_b, "conv_w": conv_w, "rgb_b": rgb_b}


def to_rgb_reference(x, style, params, skip=None, upsample=True):
    B, C, H, W = x.shape
    s = style @ params["mod_w"].T + params["mod_b"]
    w = params["conv_w"][None, :, :] * s[:, None, :]
    out = jnp.einsum("boc,bchw->bohw", w, x)
    out = out + params["rgb_b"].reshape(1, 3, 1, 1)
    if skip is not None:
        if upsample:
            skip = jax.image.resize(skip, (B, 3, H, W), method="bilinear")
        out = out + skip
    return out


if __name__ == "__main__":
    B, C, H, W = 2, 8, 16, 16
    F_ = 32

    key = jax.random.PRNGKey(0)
    kx, ks, kskip, kp, kx2 = jax.random.split(key, 5)
    x = jax.random.normal(kx, (B, C, H, W), jnp.float32)
    style = jax.random.normal(ks, (B, F_), jnp.float32)
    skip = jax.random.normal(kskip, (B, 3, H // 2, W // 2), jnp.float32)
    params = init_to_rgb_params(kp, C, F_)

    # Case 1: skip=None, single full-extent spatial tile.
    out1 = jax.block_until_ready(to_rgb_forward(x, style, params, skip=None))
    ref1 = to_rgb_reference(x, style, params, skip=None)
    assert out1.shape == (B, 3, H, W)
    assert jnp.allclose(out1, ref1, atol=1e-4, rtol=1e-4)

    # Case 2: with skip (bilinear x2 upsample + add).
    out2 = jax.block_until_ready(
        to_rgb_forward(x, style, params, skip=skip, upsample=True))
    ref2 = to_rgb_reference(x, style, params, skip=skip, upsample=True)
    assert out2.shape == (B, 3, H, W)
    assert jnp.allclose(out2, ref2, atol=1e-4, rtol=1e-4)

    # Case 3: force multi-tile spatial pipelining (HW=256 -> two 128-lane tiles).
    out3 = jax.block_until_ready(
        to_rgb_forward(x, style, params, skip=skip, upsample=True,
                       max_hw_tile=128))
    assert jnp.allclose(out3, ref2, atol=1e-4, rtol=1e-4)

    # Case 4: ragged spatial extent -> padded tiles (HW=144, tile=128, pad to 256).
    xr = jax.random.normal(kx2, (B, C, 12, 12), jnp.float32)
    out4 = jax.block_until_ready(
        to_rgb_forward(xr, style, params, skip=None, max_hw_tile=128))
    ref4 = to_rgb_reference(xr, style, params, skip=None)
    assert out4.shape == (B, 3, 12, 12)
    assert jnp.allclose(out4, ref4, atol=1e-4, rtol=1e-4)

    # Case 5: bf16 activation streaming (halved HBM traffic), f32 accumulation.
    out5 = jax.block_until_ready(
        to_rgb_forward(x, style, params, skip=skip, upsample=True,
                       compute_dtype=jnp.bfloat16, max_hw_tile=128))
    assert jnp.allclose(out5, ref2, atol=5e-2, rtol=5e-2)

    print("KERNEL_OK")
</pallas_src>

<mosaic_0001>
module attributes {stable_mosaic.version = 11 : i64} {
  func.func @kernel(%arg0: i32, %arg1: i32, %arg2: memref<1x3x8xf32, #tpu.memory_space<vmem>>, %arg3: memref<3x1xf32, #tpu.memory_space<vmem>>, %arg4: memref<1x8x256xf32, #tpu.memory_space<vmem>>, %arg5: memref<1x3x256xf32, #tpu.memory_space<vmem>>) attributes {dimension_semantics = [#tpu.dimension_semantics<parallel>, #tpu.dimension_semantics<parallel>], iteration_bounds = array<i64: 2, 1>, scalar_prefetch = 0 : i64, scratch_operands = 0 : i64, tpu.core_type = #tpu.core_type<tc>, window_params = [{transform_indices = @transform_0, window_bounds = array<i64: 1, 3, 8>}, {pipeline_mode = #tpu.pipeline_mode<synchronous>, transform_indices = @transform_1, window_bounds = array<i64: 3, 1>}, {transform_indices = @transform_2, window_bounds = array<i64: 1, 8, 256>}, {transform_indices = @transform_3, window_bounds = array<i64: 1, 3, 256>}]} {
    %c0 = arith.constant 0 : index
    %c0_0 = arith.constant 0 : index
    %c0_1 = arith.constant 0 : index
    %0 = vector.load %arg2[%c0, %c0_0, %c0_1] : memref<1x3x8xf32, #tpu.memory_space<vmem>>, vector<1x3x8xf32>
    %1 = vector.shape_cast %0 : vector<1x3x8xf32> to vector<3x8xf32>
    %c0_2 = arith.constant 0 : index
    %c0_3 = arith.constant 0 : index
    %c0_4 = arith.constant 0 : index
    %2 = vector.load %arg4[%c0_2, %c0_3, %c0_4] : memref<1x8x256xf32, #tpu.memory_space<vmem>>, vector<1x8x256xf32>
    %3 = vector.shape_cast %2 : vector<1x8x256xf32> to vector<8x256xf32>
    %cst = arith.constant dense<0.000000e+00> : vector<3x256xf32>
    %4 = tpu.matmul %1, %3, %cst {dimension_numbers = #tpu.dot_dimension_numbers<[1], [0], [0], [1], [0, 0, 1, 1], [], []>} : vector<3x8xf32>, vector<8x256xf32>, vector<3x256xf32> -> vector<3x256xf32>
    %c0_5 = arith.constant 0 : index
    %c0_6 = arith.constant 0 : index
    %5 = vector.load %arg3[%c0_5, %c0_6] : memref<3x1xf32, #tpu.memory_space<vmem>>, vector<3x1xf32>
    %6 = vector.broadcast %5 : vector<3x1xf32> to vector<3x256xf32>
    %7 = arith.addf %4, %6 : vector<3x256xf32>
    %c0_7 = arith.constant 0 : index
    %c0_8 = arith.constant 0 : index
    %c0_9 = arith.constant 0 : index
    %8 = vector.load %arg5[%c0_7, %c0_8, %c0_9] : memref<1x3x256xf32, #tpu.memory_space<vmem>>, vector<1x3x256xf32>
    %9 = vector.shape_cast %8 : vector<1x3x256xf32> to vector<3x256xf32>
    %10 = vector.shape_cast %7 : vector<3x256xf32> to vector<1x3x256xf32>
    tpu.vector_store %arg5[%c0_7, %c0_8, %c0_9], %10 {strides = array<i32>} : memref<1x3x256xf32, #tpu.memory_space<vmem>>, vector<1x3x256xf32>,
    return
  }
  func.func @transform_0(%arg0: i32, %arg1: i32) -> (i32, i32, i32) {
    %c0_i32 = arith.constant 0 : i32
    %c0_i32_0 = arith.constant 0 : i32
    %c0_i32_1 = arith.constant 0 : i32
    return %arg0, %c0_i32, %c0_i32_0 : i32, i32, i32
  }
  func.func @transform_1(%arg0: i32, %arg1: i32) -> (i32, i32) {
    %c0_i32 = arith.constant 0 : i32
    %c0_i32_0 = arith.constant 0 : i32
    %c0_i32_1 = arith.constant 0 : i32
    return %c0_i32, %c0_i32_0 : i32, i32
  }
  func.func @transform_2(%arg0: i32, %arg1: i32) -> (i32, i32, i32) {
    %c0_i32 = arith.constant 0 : i32
    %c0_i32_0 = arith.constant 0 : i32
    return %arg0, %c0_i32, %arg1 : i32, i32, i32
  }
  func.func @transform_3(%arg0: i32, %arg1: i32) -> (i32, i32, i32) {
    %c0_i32 = arith.constant 0 : i32
    %c0_i32_0 = arith.constant 0 : i32
    return %arg0, %c0_i32, %arg1 : i32, i32, i32
  }
}

</mosaic_0001>

<llo_original>
// kernel: tpu_custom_call.1
$region0: #{tpu_custom_call.1}
  #allocation0 [shape = 'u32[]', space=smem, size = 0x4, offset = 0x4, fixed_abs, tag = 'smem constant byte address 0x4 - core index']
  #allocation1 [shape = 'u32[144,128]{1,0:T(1,128)}', space=vmem, size = 0x12000, scoped, tag = 'internal scratch']
  %s0 = inlined_call_operand.vmem [shape: f32[2,3,8], index: 0, kind: input, shape index: {}]
  %s1 = inlined_call_operand.vmem [shape: f32[3,1], index: 1, kind: input, shape index: {}]
  %s2 = inlined_call_operand.hbm [shape: f32[2,8,256], index: 2, kind: input, shape index: {}]
  %s3 = inlined_call_operand.vmem [shape: f32[2,3,256], index: 3, kind: output, shape index: {}]
  %s4 = sld [smem:[#allocation0]]
  $region49: #{tpu_custom_call.1} parent=0
    _
  %s6 = ssub.s32 1, %s4
  %s7 = scalar_select 0, %s6, %s4
  $region1: #{tpu_custom_call.1} parent=0
    #allocation2 [shape = 'u8[16384]{0}', space=vmem, size = 0x4000, scoped, tag = 'input window, operand 2']
    #allocation3 [shape = 's32[2]{0}', space=sflag, size = 0x8, scoped, tag = 'scoped memory for tpu_custom_call.1']
    %8 = vsyncpa [#allocation3], 0
    %s9 = scalar_lea.sflag [#allocation3], 1
    %10 = vsyncpa %s9, 0
    loop: start=0, step=1, limit=4
    $region2: #{tpu_custom_call.1} parent=1 // loop_pre_header
      _
    $region3: #{tpu_custom_call.1} parent=1 // loop_header
      %s12 = sphi 0, %s16
      %p13 = scmp.ge.s32.totalorder %s12, 4
      %s19 = sphi 0, %s31
      %s20 = sphi 0, %s27
      %s21 = sphi 0, %s19
      %s22 = sphi 0, %s20
      %s23 = sphi 0, %s21
      %s24 = sphi 0, %s22
      %s34 = sphi 0, %s36
      %s37 = sphi 0, %s34
      %s38 = sphi 0, %s37
      %s54 = sphi 0, %s38
      %s58 = sphi 0, %s58
      %s60 = sphi 0, %s58
      %s61 = sphi 0, %s60
      %s75 = sphi 0, %s61
      %s83 = sphi 0, %s85
      %s86 = sphi 0, %s83
      %s87 = sphi 0, %s86
      %s103 = sphi 0, %s87
      %s111 = sphi 0, %s113
      %s114 = sphi 0, %s111
      %s115 = sphi 0, %s114
      %s131 = sphi 0, %s115
    $region4: #{tpu_custom_call.1} parent=1 // loop_header_branch
      %15 = sbr.rel (%p13) target = $region8
    $region5: #{tpu_custom_call.1} parent=1 // loop_body
      %s17 = ssub.s32 %s12, 1
      %s18 = ssub.s32 %s12, 2
      %s25 = sadd.s32 1, %s20
      %p26 = scmp.ge.s32.totalorder %s25, 1
      %s27 = scalar_select %p26, 0, %s25
      %s28 = sadd.s32 1, %s19
      %s29 = scalar_select %p26, %s28, %s19
      %p30 = scmp.ge.s32.totalorder %s29, 2
      %s31 = scalar_select %p30, 0, %s29
      %s32 = ssub.s32 %s19, %s31
      %p33 = scmp.eq.s32.totalorder %s32, 0
      %s35 = sadd.s32 %s34, 1
      %s36 = scalar_select %p33, %s34, %s35
      %p39 = pneg %p33
      %p40 = scmp.eq.s32.totalorder %s12, 1
      %p41 = por %p39, %p40
      %p42 = scmp.ne.s32.totalorder %s34, %s37
      %p43 = scmp.eq.s32.totalorder %s12, 0
      %p44 = por %p42, %p43
      %p45 = scmp.ne.s32.totalorder %s34, %s37
      %p46 = scmp.eq.s32.totalorder %s17, 1
      %p47 = por %p45, %p46
      %p48 = scmp.ne.s32.totalorder %s37, %s38
      %p49 = scmp.eq.s32.totalorder %s17, 0
      %p50 = por %p48, %p49
      %p51 = scmp.ne.s32.totalorder %s37, %s38
      %p52 = scmp.eq.s32.totalorder %s18, 1
      %p53 = por %p51, %p52
      %p55 = scmp.ne.s32.totalorder %s38, %s54
      %p56 = scmp.eq.s32.totalorder %s18, 0
      %p57 = por %p55, %p56
      %s59 = sadd.s32 %s58, 1
      %p62 = scmp.eq.s32.totalorder %s12, 1
      %p63 = scmp.ne.s32.totalorder %s58, %s60
      %p64 = scmp.eq.s32.totalorder %s12, 0
      %p65 = por %p63, %p64
      %p66 = scmp.ne.s32.totalorder %s58, %s60
      %p67 = scmp.eq.s32.totalorder %s17, 1
      %p68 = por %p66, %p67
      %p69 = scmp.ne.s32.totalorder %s60, %s61
      %p70 = scmp.eq.s32.totalorder %s17, 0
      %p71 = por %p69, %p70
      %p72 = scmp.ne.s32.totalorder %s60, %s61
      %p73 = scmp.eq.s32.totalorder %s18, 1
      %p74 = por %p72, %p73
      %p76 = scmp.ne.s32.totalorder %s61, %s75
      %p77 = scmp.eq.s32.totalorder %s18, 0
      %p78 = por %p76, %p77
      %s79 = ssub.s32 %s19, %s31
      %s80 = ssub.s32 %s20, %s27
      %s81 = sor.u32 %s79, %s80
      %p82 = scmp.eq.s32.totalorder %s81, 0
      %s84 = sadd.s32 %s83, 1
      %s85 = scalar_select %p82, %s83, %s84
      %p88 = pneg %p82
      %p89 = scmp.eq.s32.totalorder %s12, 1
      %p90 = por %p88, %p89
      %p91 = scmp.ne.s32.totalorder %s83, %s86
      %p92 = scmp.eq.s32.totalorder %s12, 0
      %p93 = por %p91, %p92
      %p94 = scmp.ne.s32.totalorder %s83, %s86
      %p95 = scmp.eq.s32.totalorder %s17, 1
      %p96 = por %p94, %p95
      %p97 = scmp.ne.s32.totalorder %s86, %s87
      %p98 = scmp.eq.s32.totalorder %s17, 0
      %p99 = por %p97, %p98
      %p100 = scmp.ne.s32.totalorder %s86, %s87
      %p101 = scmp.eq.s32.totalorder %s18, 1
      %p102 = por %p100, %p101
      %p104 = scmp.ne.s32.totalorder %s87, %s103
      %p105 = scmp.eq.s32.totalorder %s18, 0
      %p106 = por %p104, %p105
      %s107 = ssub.s32 %s19, %s31
      %s108 = ssub.s32 %s20, %s27
      %s109 = sor.u32 %s107, %s108
      %p110 = scmp.eq.s32.totalorder %s109, 0
      %s112 = sadd.s32 %s111, 1
      %s113 = scalar_select %p110, %s111, %s112
      %p116 = pneg %p110
      %p117 = scmp.eq.s32.totalorder %s12, 1
      %p118 = por %p116, %p117
      %p119 = scmp.ne.s32.totalorder %s111, %s114
      %p120 = scmp.eq.s32.totalorder %s12, 0
      %p121 = por %p119, %p120
      %p122 = scmp.ne.s32.totalorder %s111, %s114
      %p123 = scmp.eq.s32.totalorder %s17, 1
      %p124 = por %p122, %p123
      %p125 = scmp.ne.s32.totalorder %s114, %s115
      %p126 = scmp.eq.s32.totalorder %s17, 0
      %p127 = por %p125, %p126
      %p128 = scmp.ne.s32.totalorder %s114, %s115
      %p129 = scmp.eq.s32.totalorder %s18, 1
      %p130 = por %p128, %p129
      %p132 = scmp.ne.s32.totalorder %s115, %s131
      %p133 = scmp.eq.s32.totalorder %s18, 0
      %p134 = por %p132, %p133
      %p135 = scmp.le.s32.totalorder 1, %s12
      %p136 = scmp.lt.s32.totalorder %s12, 3
      %p137 = pnand %p135, %p136
      %p138 = pneg %p137
      // Predicated region
      $region9: #{tpu_custom_call.1} parent=5 // pred_check
        _
      $region10: #{tpu_custom_call.1} parent=5 // pred_check_branch
        %140 = sbr.rel (%p137) target = $region12
      $region11: #{tpu_custom_call.1} parent=5 // pred_region
        %s141 = ssub.s32 %s12, 1
        // Predicated region
        $region13: #{tpu_custom_call.1} parent=11 // pred_check
          %p142 = pneg %p71
        $region14: #{tpu_custom_call.1} parent=11 // pred_check_branch
          %144 = sbr.rel (%p142) target = $region16
        $region15: #{tpu_custom_call.1} parent=11 // pred_region
          _
        $region16: #{tpu_custom_call.1} parent=11 // pred_fallthru
          _
      $region12: #{tpu_custom_call.1} parent=5 // pred_fallthru
        _
      %p145 = scmp.lt.s32.totalorder %s12, 2
      // Predicated region
      $region17: #{tpu_custom_call.1} parent=5 // pred_check
        %p146 = pneg %p145
      $region18: #{tpu_custom_call.1} parent=5 // pred_check_branch
        %148 = sbr.rel (%p146) target = $region20
      $region19: #{tpu_custom_call.1} parent=5 // pred_region
        // Predicated region
        $region21: #{tpu_custom_call.1} parent=19 // pred_check
          %p149 = pneg %p44
        $region22: #{tpu_custom_call.1} parent=19 // pred_check_branch
          %151 = sbr.rel (%p149) target = $region24
        $region23: #{tpu_custom_call.1} parent=19 // pred_region
          %p152 = scmp.lt.s32.totalorder %s19, 1
          %s153 = scalar_select %p152, %s19, 1
          %s154 = smul.addr %s153, 4
          %s155 = scalar_lea.vmem %s0, %s154
        $region24: #{tpu_custom_call.1} parent=19 // pred_fallthru
          _
        // Predicated region
        $region25: #{tpu_custom_call.1} parent=19 // pred_check
          %p156 = pneg %p93
        $region26: #{tpu_custom_call.1} parent=19 // pred_check_branch
          %158 = sbr.rel (%p156) target = $region28
        $region27: #{tpu_custom_call.1} parent=19 // pred_region
          %s159 = sand.u32 %s83, 1
          %s160 = scalar_lea.sflag [#allocation3], %s159
          %s161 = sand.u32 %s83, 1
          %s162 = smul.addr %s161, 16
          %s163 = scalar_lea.vmem [#allocation2], %s162
          %s164 = smul.u32 2, %s20
          %s166 = ssub.s32 256, 256
          %167 = vsyncadd %s160, %s166
          %s168 = smul.addr %s19, 2
          %s169 = sadd.s32 %s164, %s168
          %s170 = smul.addr %s169, 128
          %s171 = scalar_lea.hbm %s2, %s170
          %s173 = sshll.u32 %s163, 4
          %s174 = int_to_ptr.vmem [resolvable:$true] %s173
          %176 = dma.hbm_to_vmem [thread:$0]  %s171, 256, %s174, %s160
        $region28: #{tpu_custom_call.1} parent=19 // pred_fallthru
          _
      $region20: #{tpu_custom_call.1} parent=5 // pred_fallthru
        _
      %p177 = scmp.le.s32.totalorder 1, %s12
      %p178 = scmp.lt.s32.totalorder %s12, 3
      %p179 = pnand %p177, %p178
      %p180 = pneg %p179
      // Predicated region
      $region29: #{tpu_custom_call.1} parent=5 // pred_check
        _
      $region30: #{tpu_custom_call.1} parent=5 // pred_check_branch
        %182 = sbr.rel (%p179) target = $region32
      $region31: #{tpu_custom_call.1} parent=5 // pred_region
        %s183 = ssub.s32 %s12, 1
        %s184 = sand.u32 %s86, 1
        %s185 = scalar_lea.sflag [#allocation3], %s184
        %s186 = sand.u32 %s86, 1
        %s187 = smul.addr %s186, 16
        %s188 = scalar_lea.vmem [#allocation2], %s187
        // Predicated region
        $region33: #{tpu_custom_call.1} parent=31 // pred_check
          %p189 = pneg %p99
        $region34: #{tpu_custom_call.1} parent=31 // pred_check_branch
          %191 = sbr.rel (%p189) target = $region36
        $region35: #{tpu_custom_call.1} parent=31 // pred_region
          %192 = dma.done %s185, 256
        $region36: #{tpu_custom_call.1} parent=31 // pred_fallthru
          _
        %p193 = scmp.lt.s32.totalorder %s21, 1
        %s194 = scalar_select %p193, %s21, 1
        %s195 = smul.addr %s194, 4
        %s196 = scalar_lea.vmem %s0, %s195
        %p197 = pneg %p50
        %p198 = pneg %p47
        %p199 = pneg %p71
        %p200 = pneg %p68
        %s201 = sand.u32 %s86, 1
        %s202 = scalar_lea.sflag [#allocation3], %s201
        %s203 = sand.u32 %s86, 1
        %s204 = smul.addr %s203, 16
        %s205 = scalar_lea.vmem [#allocation2], %s204
        %p206 = pneg %p99
        %p207 = pneg %p96
        %p208 = pneg %p127
        %p209 = pneg %p124
        %s210 = smul.u32 2, %s22
        %p211 = scmp.lt.s32.totalorder %s21, 1
        %s212 = scalar_select %p211, %s21, 1
        %p213 = scmp.lt.s32.totalorder %s210, 1
        %s214 = scalar_select %p213, %s210, 1
        %s215 = smul.addr %s212, 2
        %s216 = sadd.s32 %s214, %s215
        %s217 = smul.addr %s216, 4
        %s218 = scalar_lea.vmem %s3, %s217
        %p219 = scmp.lt.s32.totalorder %s21, 1
        %s220 = scalar_select %p219, %s21, 1
        %s221 = smul.addr %s220, 4
        %s222 = scalar_lea.vmem %s0, %s221
        %s223 = smul.u32 2, %s22
        %s224 = smul.u32 2, %s22
        %p225 = scmp.lt.s32.totalorder %s21, 1
        %s226 = scalar_select %p225, %s21, 1
        %p227 = scmp.lt.s32.totalorder %s224, 1
        %s228 = scalar_select %p227, %s224, 1
        %s229 = smul.addr %s226, 2
        %s230 = sadd.s32 %s228, %s229
        %s231 = smul.addr %s230, 4
        %s232 = scalar_lea.vmem %s3, %s231
        %s233 = smul.u32 2, %s22
        %v234 = vld [vmem:[%s222] sm:$0x7]
        %v235 = vld [vmem:[%s188] sm:$0xff]
        %v236 = vld [vmem:[%s188 + $0x8] sm:$0xff]
        %v237 = vld [vmem:[%s1] sm:$0x7]
        %239 = vset.pattern.permute.xlu0 0
        %240 = vperm.xlu0 %239, %v237
        %v241 = vpop.permute.xlu0 %240
        %vm243 = vcmask 64512
        %v245 = vsel %vm243, %v234, 0
        %247 = vmatprep.subr.mxu0 %v236
        %248 = vmatpush1.msra.mxu0 %v235
        %249 = vmatprep.subr.mxu0 0.0
        %250 = vmatpush1.msra.mxu0 0.0
        %251 = vmatprep.subr.mxu0 0.0
        %252 = vmatpush1.msra.mxu0 0.0
        %253 = vmatprep.subr.mxu0 0.0
        %254 = vmatpush1.msra.mxu0 0.0
        %255 = vmatprep.subr.mxu0 0.0
        %256 = vmatpush1.msra.mxu0 0.0
        %257 = vmatprep.subr.mxu0 0.0
        %258 = vmatpush1.msra.mxu0 0.0
        %259 = vmatprep.subr.mxu0 0.0
        %260 = vmatpush1.msra.mxu0 0.0
        %261 = vmatprep.subr.mxu0 0.0
        %262 = vmatpush1.msra.mxu0 0.0
        %263 = vmatprep.subr.mxu0 0.0
        %264 = vmatpush1.msra.mxu0 0.0
        %265 = vmatprep.subr.mxu0 0.0
        %266 = vmatpush1.msra.mxu0 0.0
        %267 = vmatprep.subr.mxu0 0.0
        %268 = vmatpush1.msra.mxu0 0.0
        %269 = vmatprep.subr.mxu0 0.0
        %270 = vmatpush1.msra.mxu0 0.0
        %271 = vmatprep.subr.mxu0 0.0
        %272 = vmatpush1.msra.mxu0 0.0
        %273 = vmatprep.subr.mxu0 0.0
        %274 = vmatpush1.msra.mxu0 0.0
        %275 = vmatprep.subr.mxu0 0.0
        %276 = vmatpush1.msra.mxu0 0.0
        %277 = vmatprep.subr.mxu0 0.0
        %278 = vmatpush1.msra.mxu0 0.0
        %279 = vmatprep.subr.mxu0 0.0
        %280 = vmatpush1.msra.mxu0 0.0
        %281 = vmatprep.subr.mxu0 0.0
        %282 = vmatpush1.msra.mxu0 0.0
        %283 = vmatprep.subr.mxu0 0.0
        %284 = vmatpush1.msra.mxu0 0.0
        %285 = vmatprep.subr.mxu0 0.0
        %286 = vmatpush1.msra.mxu0 0.0
        %287 = vmatprep.subr.mxu0 0.0
        %288 = vmatpush1.msra.mxu0 0.0
        %289 = vmatprep.subr.mxu0 0.0
        %290 = vmatpush1.msra.mxu0 0.0
        %291 = vmatprep.subr.mxu0 0.0
        %292 = vmatpush1.msra.mxu0 0.0
        %293 = vmatprep.subr.mxu0 0.0
        %294 = vmatpush1.msra.mxu0 0.0
        %295 = vmatprep.subr.mxu0 0.0
        %296 = vmatpush1.msra.mxu0 0.0
        %297 = vmatprep.subr.mxu0 0.0
        %298 = vmatpush1.msra.mxu0 0.0
        %299 = vmatprep.subr.mxu0 0.0
        %300 = vmatpush1.msra.mxu0 0.0
        %301 = vmatprep.subr.mxu0 0.0
        %302 = vmatpush1.msra.mxu0 0.0
        %303 = vmatprep.subr.mxu0 0.0
        %304 = vmatpush1.msra.mxu0 0.0
        %305 = vmatprep.subr.mxu0 0.0
        %306 = vmatpush1.msra.mxu0 0.0
        %307 = vmatprep.subr.mxu0 0.0
        %308 = vmatpush1.msra.mxu0 0.0
        %309 = vmatprep.subr.mxu0 0.0
        %310 = vmatpush1.msra.mxu0 0.0
        %311 = vmatprep.mubr.f32.mxu0 0.0
        %312 = vmatmul.mubr.f32.gmra.mrb[0].mxu0 %v245
        %v313 = vpop.f32.mrb[0].mxu0
        %v314 = vadd.f32 %v241, %v313
        %v315 = vpop.f32.mrb[0].mxu0
        %v316 = vadd.f32 %v241, %v315
        %317 = vdwg.mxu0
        %v320 = vcombine.low %v314, %v316
        %322 = vst [vmem:[%s232] sm:$0x77] %v320
        %s323 = smul.u32 2, %s22
        %p324 = scmp.lt.s32.totalorder %s21, 1
        %s325 = scalar_select %p324, %s21, 1
        %p326 = scmp.lt.s32.totalorder %s323, 1
        %s327 = scalar_select %p326, %s323, 1
        %s328 = smul.addr %s325, 2
        %s329 = sadd.s32 %s327, %s328
        %s330 = smul.addr %s329, 4
        %s331 = scalar_lea.vmem %s3, %s330
        // Predicated region
        $region37: #{tpu_custom_call.1} parent=31 // pred_check
          %p332 = pneg %p124
        $region38: #{tpu_custom_call.1} parent=31 // pred_check_branch
          %334 = sbr.rel (%p332) target = $region40
        $region39: #{tpu_custom_call.1} parent=31 // pred_region
          %s335 = smul.u32 2, %s22
        $region40: #{tpu_custom_call.1} parent=31 // pred_fallthru
          _
      $region32: #{tpu_custom_call.1} parent=5 // pred_fallthru
        _
      %p336 = scmp.le.s32.totalorder 2, %s12
      // Predicated region
      $region41: #{tpu_custom_call.1} parent=5 // pred_check
        %p337 = pneg %p336
      $region42: #{tpu_custom_call.1} parent=5 // pred_check_branch
        %339 = sbr.rel (%p337) target = $region44
      $region43: #{tpu_custom_call.1} parent=5 // pred_region
        %s340 = ssub.s32 %s12, 2
        // Predicated region
        $region45: #{tpu_custom_call.1} parent=43 // pred_check
          %p341 = pneg %p130
        $region46: #{tpu_custom_call.1} parent=43 // pred_check_branch
          %343 = sbr.rel (%p341) target = $region48
        $region47: #{tpu_custom_call.1} parent=43 // pred_region
          %s344 = smul.u32 2, %s24
          %p345 = scmp.lt.s32.totalorder %s23, 1
          %s346 = scalar_select %p345, %s23, 1
          %p347 = scmp.lt.s32.totalorder %s344, 1
          %s348 = scalar_select %p347, %s344, 1
          %s349 = smul.addr %s346, 2
          %s350 = sadd.s32 %s348, %s349
          %s351 = smul.addr %s350, 4
          %s352 = scalar_lea.vmem %s3, %s351
        $region48: #{tpu_custom_call.1} parent=43 // pred_fallthru
          _
      $region44: #{tpu_custom_call.1} parent=5 // pred_fallthru
        _
    $region6: #{tpu_custom_call.1} parent=1 // loop_footer
      %s16 = sadd.s32 1, %s12
    $region7: #{tpu_custom_call.1} parent=1 // loop_footer_branch
      %11 = sbr.rel target = $region3
    $region8: #{tpu_custom_call.1} parent=1 // loop_exit
      _
    %353 = vsyncpa [#allocation3], 1
    %s354 = scalar_lea.sflag [#allocation3], 1
    %355 = vsyncpa %s354, 1

</llo_original>
